<compile_context>
chip_gen: v7x
topology: tpu7x:2x2x1
jax: 0.10.0
libtpu: 0.0.40
codegen_flags: <defaults>
</compile_context>

<pallas_src>
import math

import jax
import jax.numpy as jnp
from jax.experimental import pallas as pl
from jax.experimental.pallas import tpu as pltpu


HIDDEN = 256        # nn.Linear(n_inputs + n_actions, 256), Linear(256, 256)
_MAX_TILE_M = 256   # MXU-height batch tile (review: 256 for v6e/v7x)


def _round_up(x, m):
    return ((x + m - 1) // m) * m


def _actor_kernel(s_ref, a_ref, w1s_ref, w1a_ref, b1_ref, w2_ref, b2_ref,
                  wq_ref, bq_ref, o_ref):
    # Layer 1: split matmul == concat([states, actions], 1) @ w1
    h1 = jnp.dot(s_ref[...], w1s_ref[...], preferred_element_type=jnp.float32)
    h1 = h1 + jnp.dot(a_ref[...], w1a_ref[...], preferred_element_type=jnp.float32)
    h1 = jnp.maximum(h1 + b1_ref[...], 0.0)                       # (TM, 256) f32

    # Layer 2
    h2 = jnp.dot(h1.astype(jnp.bfloat16), w2_ref[...],
                 preferred_element_type=jnp.float32)
    h2 = jnp.maximum(h2 + b2_ref[...], 0.0)                       # (TM, 256) f32

    # q head (out_features=1): VPU multiply + lane reduce, skip the MXU.
    q = jnp.sum(h2 * wq_ref[...], axis=-1, keepdims=True) + bq_ref[0, 0]
    o_ref[...] = q.astype(o_ref.dtype)                            # (TM, 1)


def actor_forward(states, actions, kernel_params):
    """states: (B, n_inputs), actions: (B, n_actions) -> (B, 1) float32."""
    w1s, w1a, b1, w2, b2, wq_row, bq = kernel_params
    B, n_inputs = states.shape
    n_actions = actions.shape[1]

    tm = min(_MAX_TILE_M, _round_up(B, 8))
    b_pad = _round_up(B, tm)

    s = states.astype(jnp.bfloat16)
    a = actions.astype(jnp.bfloat16)
    if b_pad != B:
        s = jnp.pad(s, ((0, b_pad - B), (0, 0)))
        a = jnp.pad(a, ((0, b_pad - B), (0, 0)))

    out = pl.pallas_call(
        _actor_kernel,
        out_shape=jax.ShapeDtypeStruct((b_pad, 1), jnp.float32),
        grid=(b_pad // tm,),
        in_specs=[
            pl.BlockSpec((tm, n_inputs), lambda i: (i, 0)),       # states tile
            pl.BlockSpec((tm, n_actions), lambda i: (i, 0)),      # actions tile
            pl.BlockSpec((n_inputs, HIDDEN), lambda i: (0, 0)),   # w1_s (resident)
            pl.BlockSpec((n_actions, HIDDEN), lambda i: (0, 0)),  # w1_a (resident)
            pl.BlockSpec((1, HIDDEN), lambda i: (0, 0)),          # b1
            pl.BlockSpec((HIDDEN, HIDDEN), lambda i: (0, 0)),     # w2 (resident)
            pl.BlockSpec((1, HIDDEN), lambda i: (0, 0)),          # b2
            pl.BlockSpec((1, HIDDEN), lambda i: (0, 0)),          # wq as a row
            pl.BlockSpec(memory_space=pltpu.MemorySpace.SMEM),    # bq scalar
        ],
        out_specs=pl.BlockSpec((tm, 1), lambda i: (i, 0)),
        compiler_params=pltpu.CompilerParams(
            dimension_semantics=("parallel",)),
    )(s, a, w1s, w1a, b1, w2, b2, wq_row, bq)

    return out[:B]


def init_params(key, n_inputs, n_actions):
    """PyTorch-default init (uniform(-1/sqrt(fan_in), 1/sqrt(fan_in))),
    weights stored as (in_features, out_features) so y = x @ W + b."""
    d_in = n_inputs + n_actions
    keys = jax.random.split(key, 6)

    def lin(kw, kb, fan_in, fan_out):
        bound = 1.0 / math.sqrt(fan_in)
        w = jax.random.uniform(kw, (fan_in, fan_out), jnp.float32, -bound, bound)
        b = jax.random.uniform(kb, (fan_out,), jnp.float32, -bound, bound)
        return w, b

    w1, b1 = lin(keys[0], keys[1], d_in, HIDDEN)
    w2, b2 = lin(keys[2], keys[3], HIDDEN, HIDDEN)
    wq, bq = lin(keys[4], keys[5], HIDDEN, 1)
    return (w1, b1, w2, b2, wq, bq)


def prepare_params(params, n_inputs):
    """Convert full f32 params to the kernel layout:
    split w1, bf16 big weights, row-shaped biases, (1,1) SMEM scalar bq."""
    w1, b1, w2, b2, wq, bq = params
    w1s = w1[:n_inputs].astype(jnp.bfloat16)       # (n_inputs, 256)
    w1a = w1[n_inputs:].astype(jnp.bfloat16)       # (n_actions, 256)
    b1r = b1.reshape(1, HIDDEN).astype(jnp.float32)
    w2b = w2.astype(jnp.bfloat16)                  # (256, 256)
    b2r = b2.reshape(1, HIDDEN).astype(jnp.float32)
    wq_row = wq.reshape(1, HIDDEN).astype(jnp.float32)
    bqs = bq.reshape(1, 1).astype(jnp.float32)
    return (w1s, w1a, b1r, w2b, b2r, wq_row, bqs)


def reference_forward(states, actions, kernel_params):
    """Same math / same precision choices as the kernel, in plain JAX."""
    w1s, w1a, b1, w2, b2, wq_row, bq = kernel_params
    s = states.astype(jnp.bfloat16)
    a = actions.astype(jnp.bfloat16)
    h1 = (jnp.dot(s, w1s, preferred_element_type=jnp.float32)
          + jnp.dot(a, w1a, preferred_element_type=jnp.float32) + b1)
    h1 = jnp.maximum(h1, 0.0)
    h2 = jnp.dot(h1.astype(jnp.bfloat16), w2,
                 preferred_element_type=jnp.float32) + b2
    h2 = jnp.maximum(h2, 0.0)
    return jnp.sum(h2 * wq_row, axis=-1, keepdims=True) + bq[0, 0]


if __name__ == "__main__":
    key = jax.random.PRNGKey(0)
    k_s, k_a, k_p = jax.random.split(key, 3)

    B, n_inputs, n_actions = 8, 16, 4
    states = jax.random.normal(k_s, (B, n_inputs), dtype=jnp.float32)
    actions = jax.random.normal(k_a, (B, n_actions), dtype=jnp.float32)

    params = init_params(k_p, n_inputs, n_actions)
    kparams = prepare_params(params, n_inputs)

    out = actor_forward(states, actions, kparams)
    out = jax.block_until_ready(out)

    ref = reference_forward(states, actions, kparams)
    assert out.shape == (B, 1), out.shape
    assert jnp.allclose(out, ref, atol=1e-3, rtol=1e-3), "mismatch vs reference"

    print("KERNEL_OK")
</pallas_src>

<mosaic_0001>
module attributes {stable_mosaic.version = 11 : i64} {
  func.func @_actor_kernel(%arg0: i32, %arg1: memref<8x16xbf16, #tpu.memory_space<vmem>>, %arg2: memref<8x4xbf16, #tpu.memory_space<vmem>>, %arg3: memref<16x256xbf16, #tpu.memory_space<vmem>>, %arg4: memref<4x256xbf16, #tpu.memory_space<vmem>>, %arg5: memref<1x256xf32, #tpu.memory_space<vmem>>, %arg6: memref<256x256xbf16, #tpu.memory_space<vmem>>, %arg7: memref<1x256xf32, #tpu.memory_space<vmem>>, %arg8: memref<1x256xf32, #tpu.memory_space<vmem>>, %arg9: memref<1x1xf32, #tpu.memory_space<smem>>, %arg10: memref<8x1xf32, #tpu.memory_space<vmem>>) attributes {dimension_semantics = [#tpu.dimension_semantics<parallel>], iteration_bounds = array<i64: 1>, scalar_prefetch = 0 : i64, scratch_operands = 0 : i64, tpu.core_type = #tpu.core_type<tc>, window_params = [{transform_indices = @transform_0, window_bounds = array<i64: 8, 16>}, {transform_indices = @transform_1, window_bounds = array<i64: 8, 4>}, {pipeline_mode = #tpu.pipeline_mode<synchronous>, transform_indices = @transform_2, window_bounds = array<i64: 16, 256>}, {pipeline_mode = #tpu.pipeline_mode<synchronous>, transform_indices = @transform_3, window_bounds = array<i64: 4, 256>}, {pipeline_mode = #tpu.pipeline_mode<synchronous>, transform_indices = @transform_4, window_bounds = array<i64: 1, 256>}, {pipeline_mode = #tpu.pipeline_mode<synchronous>, transform_indices = @transform_5, window_bounds = array<i64: 256, 256>}, {pipeline_mode = #tpu.pipeline_mode<synchronous>, transform_indices = @transform_6, window_bounds = array<i64: 1, 256>}, {pipeline_mode = #tpu.pipeline_mode<synchronous>, transform_indices = @transform_7, window_bounds = array<i64: 1, 256>}, {transform_indices = @transform_8, window_bounds = array<i64: 1, 1>}, {transform_indices = @transform_9, window_bounds = array<i64: 8, 1>}]} {
    %c0 = arith.constant 0 : index
    %c0_0 = arith.constant 0 : index
    %0 = vector.load %arg1[%c0, %c0_0] : memref<8x16xbf16, #tpu.memory_space<vmem>>, vector<8x16xbf16>
    %c0_1 = arith.constant 0 : index
    %c0_2 = arith.constant 0 : index
    %1 = vector.load %arg3[%c0_1, %c0_2] : memref<16x256xbf16, #tpu.memory_space<vmem>>, vector<16x256xbf16>
    %cst = arith.constant dense<0.000000e+00> : vector<8x256xf32>
    %2 = tpu.matmul %0, %1, %cst {dimension_numbers = #tpu.dot_dimension_numbers<[1], [0], [0], [1], [0, 0, 1, 1], [], []>} : vector<8x16xbf16>, vector<16x256xbf16>, vector<8x256xf32> -> vector<8x256xf32>
    %c0_3 = arith.constant 0 : index
    %c0_4 = arith.constant 0 : index
    %3 = vector.load %arg2[%c0_3, %c0_4] : memref<8x4xbf16, #tpu.memory_space<vmem>>, vector<8x4xbf16>
    %c0_5 = arith.constant 0 : index
    %c0_6 = arith.constant 0 : index
    %4 = vector.load %arg4[%c0_5, %c0_6] : memref<4x256xbf16, #tpu.memory_space<vmem>>, vector<4x256xbf16>
    %cst_7 = arith.constant dense<0.000000e+00> : vector<8x256xf32>
    %5 = tpu.matmul %3, %4, %cst_7 {dimension_numbers = #tpu.dot_dimension_numbers<[1], [0], [0], [1], [0, 0, 1, 1], [], []>} : vector<8x4xbf16>, vector<4x256xbf16>, vector<8x256xf32> -> vector<8x256xf32>
    %6 = arith.addf %2, %5 : vector<8x256xf32>
    %c0_8 = arith.constant 0 : index
    %c0_9 = arith.constant 0 : index
    %7 = vector.load %arg5[%c0_8, %c0_9] : memref<1x256xf32, #tpu.memory_space<vmem>>, vector<1x256xf32>
    %8 = vector.broadcast %7 : vector<1x256xf32> to vector<8x256xf32>
    %9 = arith.addf %6, %8 : vector<8x256xf32>
    %cst_10 = arith.constant 0.000000e+00 : f32
    %10 = vector.broadcast %cst_10 : f32 to vector<8x256xf32>
    %11 = arith.maximumf %9, %10 : vector<8x256xf32>
    %12 = arith.truncf %11 : vector<8x256xf32> to vector<8x256xbf16>
    %c0_11 = arith.constant 0 : index
    %c0_12 = arith.constant 0 : index
    %13 = vector.load %arg6[%c0_11, %c0_12] : memref<256x256xbf16, #tpu.memory_space<vmem>>, vector<256x256xbf16>
    %cst_13 = arith.constant dense<0.000000e+00> : vector<8x256xf32>
    %14 = tpu.matmul %12, %13, %cst_13 {dimension_numbers = #tpu.dot_dimension_numbers<[1], [0], [0], [1], [0, 0, 1, 1], [], []>} : vector<8x256xbf16>, vector<256x256xbf16>, vector<8x256xf32> -> vector<8x256xf32>
    %c0_14 = arith.constant 0 : index
    %c0_15 = arith.constant 0 : index
    %15 = vector.load %arg7[%c0_14, %c0_15] : memref<1x256xf32, #tpu.memory_space<vmem>>, vector<1x256xf32>
    %16 = vector.broadcast %15 : vector<1x256xf32> to vector<8x256xf32>
    %17 = arith.addf %14, %16 : vector<8x256xf32>
    %cst_16 = arith.constant 0.000000e+00 : f32
    %18 = vector.broadcast %cst_16 : f32 to vector<8x256xf32>
    %19 = arith.maximumf %17, %18 : vector<8x256xf32>
    %c0_17 = arith.constant 0 : index
    %c0_18 = arith.constant 0 : index
    %20 = vector.load %arg8[%c0_17, %c0_18] : memref<1x256xf32, #tpu.memory_space<vmem>>, vector<1x256xf32>
    %21 = vector.broadcast %20 : vector<1x256xf32> to vector<8x256xf32>
    %22 = arith.mulf %19, %21 : vector<8x256xf32>
    %cst_19 = arith.constant dense<0.000000e+00> : vector<8xf32>
    %23 = vector.multi_reduction <add>, %22, %cst_19 [1] : vector<8x256xf32> to vector<8xf32>
    %24 = vector.shape_cast %23 : vector<8xf32> to vector<8x1xf32>
    %c0_20 = arith.constant 0 : index
    %c0_21 = arith.constant 0 : index
    %25 = memref.load %arg9[%c0_20, %c0_21] : memref<1x1xf32, #tpu.memory_space<smem>>
    %26 = vector.broadcast %25 : f32 to vector<8x1xf32>
    %27 = arith.addf %24, %26 : vector<8x1xf32>
    %c0_22 = arith.constant 0 : index
    %c0_23 = arith.constant 0 : index
    %28 = vector.load %arg10[%c0_22, %c0_23] : memref<8x1xf32, #tpu.memory_space<vmem>>, vector<8x1xf32>
    tpu.vector_store %arg10[%c0_22, %c0_23], %27 {strides = array<i32>} : memref<8x1xf32, #tpu.memory_space<vmem>>, vector<8x1xf32>,
    return
  }
  func.func @transform_0(%arg0: i32) -> (i32, i32) {
    %c0_i32 = arith.constant 0 : i32
    %c0_i32_0 = arith.constant 0 : i32
    return %arg0, %c0_i32 : i32, i32
  }
  func.func @transform_1(%arg0: i32) -> (i32, i32) {
    %c0_i32 = arith.constant 0 : i32
    %c0_i32_0 = arith.constant 0 : i32
    return %arg0, %c0_i32 : i32, i32
  }
  func.func @transform_2(%arg0: i32) -> (i32, i32) {
    %c0_i32 = arith.constant 0 : i32
    %c0_i32_0 = arith.constant 0 : i32
    %c0_i32_1 = arith.constant 0 : i32
    return %c0_i32, %c0_i32_0 : i32, i32
  }
  func.func @transform_3(%arg0: i32) -> (i32, i32) {
    %c0_i32 = arith.constant 0 : i32
    %c0_i32_0 = arith.constant 0 : i32
    %c0_i32_1 = arith.constant 0 : i32
    return %c0_i32, %c0_i32_0 : i32, i32
  }
  func.func @transform_4(%arg0: i32) -> (i32, i32) {
    %c0_i32 = arith.constant 0 : i32
    %c0_i32_0 = arith.constant 0 : i32
    %c0_i32_1 = arith.constant 0 : i32
    return %c0_i32, %c0_i32_0 : i32, i32
  }
  func.func @transform_5(%arg0: i32) -> (i32, i32) {
    %c0_i32 = arith.constant 0 : i32
    %c0_i32_0 = arith.constant 0 : i32
    %c0_i32_1 = arith.constant 0 : i32
    return %c0_i32, %c0_i32_0 : i32, i32
  }
  func.func @transform_6(%arg0: i32) -> (i32, i32) {
    %c0_i32 = arith.constant 0 : i32
    %c0_i32_0 = arith.constant 0 : i32
    %c0_i32_1 = arith.constant 0 : i32
    return %c0_i32, %c0_i32_0 : i32, i32
  }
  func.func @transform_7(%arg0: i32) -> (i32, i32) {
    %c0_i32 = arith.constant 0 : i32
    %c0_i32_0 = arith.constant 0 : i32
    %c0_i32_1 = arith.constant 0 : i32
    return %c0_i32, %c0_i32_0 : i32, i32
  }
  func.func @transform_8(%arg0: i32) -> (i32, i32) {
    %c0_i32 = arith.constant 0 : i32
    %c0_i32_0 = arith.constant 0 : i32
    %c0_i32_1 = arith.constant 0 : i32
    return %c0_i32, %c0_i32_0 : i32, i32
  }
  func.func @transform_9(%arg0: i32) -> (i32, i32) {
    %c0_i32 = arith.constant 0 : i32
    %c0_i32_0 = arith.constant 0 : i32
    return %arg0, %c0_i32 : i32, i32
  }
}

</mosaic_0001>

<llo_original>
// kernel: tpu_custom_call.1
$region0: #{tpu_custom_call.1}
  #allocation0 [shape = 'u32[]', space=smem, size = 0x4, offset = 0x4, fixed_abs, tag = 'smem constant byte address 0x4 - core index']
  #allocation1 [shape = 'u32[144,128]{1,0:T(1,128)}', space=vmem, size = 0x12000, scoped, tag = 'internal scratch']
  #allocation2 [shape = 'f32[1,1]{1,0:T(1,128)S(6)}', space=smem, size = 0x200, scoped, tag = 'scoped memory for tpu_custom_call.1']
  %s0 = inlined_call_operand.hbm [shape: bf16[8,16], index: 0, kind: input, shape index: {}]
  %s1 = inlined_call_operand.vmem [shape: bf16[8,4], index: 1, kind: input, shape index: {}]
  %s2 = inlined_call_operand.vmem [shape: bf16[16,256], index: 2, kind: input, shape index: {}]
  %s3 = inlined_call_operand.vmem [shape: bf16[4,256], index: 3, kind: input, shape index: {}]
  %s4 = inlined_call_operand.vmem [shape: f32[1,256], index: 4, kind: input, shape index: {}]
  %s5 = inlined_call_operand.hbm [shape: bf16[256,256], index: 5, kind: input, shape index: {}]
  %s6 = inlined_call_operand.vmem [shape: f32[1,256], index: 6, kind: input, shape index: {}]
  %s7 = inlined_call_operand.vmem [shape: f32[1,256], index: 7, kind: input, shape index: {}]
  %s8 = inlined_call_operand.<no memory space> [shape: f32[1,1], index: 8, kind: input, shape index: {}]
  %s9 = inlined_call_operand.vmem [shape: f32[8,1], index: 9, kind: output, shape index: {}]
  %s10 = sld [smem:[#allocation0]]
  $region54: #{tpu_custom_call.1} parent=0
    _
  %s12 = ssub.s32 1, %s10
  %s13 = scalar_select 0, %s12, %s10
  %14 = sst [smem:[#allocation2]] %s8
  $region1: #{tpu_custom_call.1} parent=0
    #allocation3 [shape = 'u8[2048]{0}', space=vmem, size = 0x800, scoped, tag = 'input window, operand 0, single buffered']
    #allocation4 [shape = 's32[1]{0}', space=sflag, size = 0x4, scoped, tag = 'scoped memory for tpu_custom_call.1']
    #allocation5 [shape = 'u8[131072]{0}', space=vmem, size = 0x20000, scoped, tag = 'input window, operand 5, single buffered']
    #allocation6 [shape = 's32[1]{0}', space=sflag, size = 0x4, scoped, tag = 'scoped memory for tpu_custom_call.1']
    %15 = vsyncpa [#allocation4], 0
    %16 = vsyncpa [#allocation6], 0
    // Predicated region
    $region2: #{tpu_custom_call.1} parent=1 // pred_check
      _
    $region3: #{tpu_custom_call.1} parent=1 // pred_check_branch
      %18 = sbr.rel (0) target = $region5
    $region4: #{tpu_custom_call.1} parent=1 // pred_region
      %s20 = ssub.s32 64, 64
      %21 = vsyncadd [#allocation4], %s20
      %s23 = sshll.u32 [#allocation3], 4
      %s24 = int_to_ptr.vmem [resolvable:$true] %s23
      %26 = dma.hbm_to_vmem [thread:$0]  %s0, 64, %s24, [#allocation4]
    $region5: #{tpu_custom_call.1} parent=1 // pred_fallthru
      _
    // Predicated region
    $region6: #{tpu_custom_call.1} parent=1 // pred_check
      _
    $region7: #{tpu_custom_call.1} parent=1 // pred_check_branch
      %28 = sbr.rel (0) target = $region9
    $region8: #{tpu_custom_call.1} parent=1 // pred_region
      _
    $region9: #{tpu_custom_call.1} parent=1 // pred_fallthru
      _
    // Predicated region
    $region10: #{tpu_custom_call.1} parent=1 // pred_check
      _
    $region11: #{tpu_custom_call.1} parent=1 // pred_check_branch
      %30 = sbr.rel (0) target = $region13
    $region12: #{tpu_custom_call.1} parent=1 // pred_region
      _
    $region13: #{tpu_custom_call.1} parent=1 // pred_fallthru
      _
    // Predicated region
    $region14: #{tpu_custom_call.1} parent=1 // pred_check
      _
    $region15: #{tpu_custom_call.1} parent=1 // pred_check_branch
      %32 = sbr.rel (0) target = $region17
    $region16: #{tpu_custom_call.1} parent=1 // pred_region
      _
    $region17: #{tpu_custom_call.1} parent=1 // pred_fallthru
      _
    // Predicated region
    $region18: #{tpu_custom_call.1} parent=1 // pred_check
      _
    $region19: #{tpu_custom_call.1} parent=1 // pred_check_branch
      %34 = sbr.rel (0) target = $region21
    $region20: #{tpu_custom_call.1} parent=1 // pred_region
      _
    $region21: #{tpu_custom_call.1} parent=1 // pred_fallthru
      _
    // Predicated region
    $region22: #{tpu_custom_call.1} parent=1 // pred_check
      _
    $region23: #{tpu_custom_call.1} parent=1 // pred_check_branch
      %36 = sbr.rel (0) target = $region25
    $region24: #{tpu_custom_call.1} parent=1 // pred_region
      %s38 = ssub.s32 4096, 4096
      %39 = vsyncadd [#allocation6], %s38
      %s40 = sshll.u32 [#allocation5], 4
      %s41 = int_to_ptr.vmem [resolvable:$true] %s40
      %46 = dma.hbm_to_vmem [thread:$0]  %s5, 4096, %s41, [#allocation6], 128, 128, 8
    $region25: #{tpu_custom_call.1} parent=1 // pred_fallthru
      _
    // Predicated region
    $region26: #{tpu_custom_call.1} parent=1 // pred_check
      _
    $region27: #{tpu_custom_call.1} parent=1 // pred_check_branch
      %48 = sbr.rel (0) target = $region29
    $region28: #{tpu_custom_call.1} parent=1 // pred_region
      _
    $region29: #{tpu_custom_call.1} parent=1 // pred_fallthru
      _
    // Predicated region
    $region30: #{tpu_custom_call.1} parent=1 // pred_check
      _
    $region31: #{tpu_custom_call.1} parent=1 // pred_check_branch
      %50 = sbr.rel (0) target = $region33
    $region32: #{tpu_custom_call.1} parent=1 // pred_region
      _
    $region33: #{tpu_custom_call.1} parent=1 // pred_fallthru
      _
    // Predicated region
    $region34: #{tpu_custom_call.1} parent=1 // pred_check
      _
    $region35: #{tpu_custom_call.1} parent=1 // pred_check_branch
      %52 = sbr.rel (0) target = $region37
    $region36: #{tpu_custom_call.1} parent=1 // pred_region
      _
    $region37: #{tpu_custom_call.1} parent=1 // pred_fallthru
      _
    // Predicated region
    $region38: #{tpu_custom_call.1} parent=1 // pred_check
      _
    $region39: #{tpu_custom_call.1} parent=1 // pred_check_branch
      %54 = sbr.rel (0) target = $region41
    $region40: #{tpu_custom_call.1} parent=1 // pred_region
      %55 = dma.done [#allocation4], 64
    $region41: #{tpu_custom_call.1} parent=1 // pred_fallthru
      _
    // Predicated region
    $region42: #{tpu_custom_call.1} parent=1 // pred_check
      _
    $region43: #{tpu_custom_call.1} parent=1 // pred_check_branch
      %57 = sbr.rel (0) target = $region45
    $region44: #{tpu_custom_call.1} parent=1 // pred_region
      %58 = dma.done [#allocation6], 4096
    $region45: #{tpu_custom_call.1} parent=1 // pred_fallthru
      _
    %v60 = vld [vmem:[#allocation3] sm:$0xf]
    %v61 = vld [vmem:[%s2] sm:$0xff]
    %v62 = vld [vmem:[%s2 + $0x8] sm:$0xff]
    %v63 = vld [vmem:[%s1] sm:$0xf]
    %v64 = vld [vmem:[%s3] sm:$0xf]
    %v67 = vunpack.c.l.s4 1983009808
    %v68 = vunpack.c.0.s8 %v67
    %v69 = vlaneseq
    %v70 = vshrl.u32 %v69, 7
    %v71 = vsub.s32 %v68, %v70
    %v72 = vrot.slane %v64, %v71
    %v73 = vcombine.high %v72, %v72
    %vm74 = vcmask 31744
    %v76 = vsel %vm74, %v63, 0
    %vm78 = vcmask 1041408
    %v80 = vsel %vm78, %v72, 0
    %v83 = vsel %vm78, %v73, 0
    %85 = vmatprep.subr.bf16.mxu0 %v83
    %86 = vmatpush1.bf16.msra.mxu0 %v80
    %87 = vmatprep.subr.bf16.mxu0 0
    %88 = vmatpush1.bf16.msra.mxu0 0
    %89 = vmatprep.subr.bf16.mxu0 0
    %90 = vmatpush1.bf16.msra.mxu0 0
    %91 = vmatprep.subr.bf16.mxu0 0
    %92 = vmatpush1.bf16.msra.mxu0 0
    %93 = vmatprep.subr.bf16.mxu0 0
    %94 = vmatpush1.bf16.msra.mxu0 0
    %95 = vmatprep.subr.bf16.mxu0 0
    %96 = vmatpush1.bf16.msra.mxu0 0
    %97 = vmatprep.subr.bf16.mxu0 0
    %98 = vmatpush1.bf16.msra.mxu0 0
    %99 = vmatprep.subr.bf16.mxu0 0
    %100 = vmatpush1.bf16.msra.mxu0 0
    %101 = vmatprep.subr.bf16.mxu0 0
    %102 = vmatpush1.bf16.msra.mxu0 0
    %103 = vmatprep.subr.bf16.mxu0 0
    %104 = vmatpush1.bf16.msra.mxu0 0
    %105 = vmatprep.subr.bf16.mxu0 0
    %106 = vmatpush1.bf16.msra.mxu0 0
    %107 = vmatprep.subr.bf16.mxu0 0
    %108 = vmatpush1.bf16.msra.mxu0 0
    %109 = vmatprep.subr.bf16.mxu0 0
    %110 = vmatpush1.bf16.msra.mxu0 0
    %111 = vmatprep.subr.bf16.mxu0 0
    %112 = vmatpush1.bf16.msra.mxu0 0
    %113 = vmatprep.subr.bf16.mxu0 0
    %114 = vmatpush1.bf16.msra.mxu0 0
    %115 = vmatprep.subr.bf16.mxu0 0
    %116 = vmatpush1.bf16.msra.mxu0 0
    %117 = vmatprep.mubr.bf16.mxu0 0
    %118 = vmatmul.mubr.bf16.gmra.mrb[0].mxu0 %v76
    %v119 = vpop.f32.mrb[0].mxu0
    %v120 = vadd.f32 0.0, %v119
    %v121 = vpop.f32.mrb[0].mxu0
    %v122 = vadd.f32 0.0, %v121
    %v123 = vpop.f32.mrb[0].mxu0
    %v124 = vpop.f32.mrb[0].mxu0
    %125 = vdwg.mxu0
    %v128 = vunpack.c.l.b16 %v61
    %v129 = vunpack.c.h.b16 %v61
    %v130 = vunpack.c.l.b16 %v62
    %v131 = vunpack.c.h.b16 %v62
    %v132 = vpack.c.b16 %v130, %v128
    %v133 = vpack.c.b16 %v131, %v129
    %vm136 = vcmask 130048
    %v138 = vsel %vm136, %v60, 0
    %140 = vmatprep.subr.bf16.mxu0 %v133
    %141 = vmatpush1.bf16.msra.mxu0 %v132
    %142 = vmatprep.subr.bf16.mxu0 0
    %143 = vmatpush1.bf16.msra.mxu0 0
    %144 = vmatprep.subr.bf16.mxu0 0
    %145 = vmatpush1.bf16.msra.mxu0 0
    %146 = vmatprep.subr.bf16.mxu0 0
    %147 = vmatpush1.bf16.msra.mxu0 0
    %148 = vmatprep.subr.bf16.mxu0 0
    %149 = vmatpush1.bf16.msra.mxu0 0
    %150 = vmatprep.subr.bf16.mxu0 0
    %151 = vmatpush1.bf16.msra.mxu0 0
    %152 = vmatprep.subr.bf16.mxu0 0
    %153 = vmatpush1.bf16.msra.mxu0 0
    %154 = vmatprep.subr.bf16.mxu0 0
    %155 = vmatpush1.bf16.msra.mxu0 0
    %156 = vmatprep.subr.bf16.mxu0 0
    %157 = vmatpush1.bf16.msra.mxu0 0
    %158 = vmatprep.subr.bf16.mxu0 0
    %159 = vmatpush1.bf16.msra.mxu0 0
    %160 = vmatprep.subr.bf16.mxu0 0
    %161 = vmatpush1.bf16.msra.mxu0 0
    %162 = vmatprep.subr.bf16.mxu0 0
    %163 = vmatpush1.bf16.msra.mxu0 0
    %164 = vmatprep.subr.bf16.mxu0 0
    %165 = vmatpush1.bf16.msra.mxu0 0
    %166 = vmatprep.subr.bf16.mxu0 0
    %167 = vmatpush1.bf16.msra.mxu0 0
    %168 = vmatprep.subr.bf16.mxu0 0
    %169 = vmatpush1.bf16.msra.mxu0 0
    %170 = vmatprep.subr.bf16.mxu0 0
    %171 = vmatpush1.bf16.msra.mxu0 0
    %172 = vmatprep.mubr.bf16.mxu0 0
    %173 = vmatmul.mubr.bf16.gmra.mrb[0].mxu0 %v138
    %v174 = vpop.f32.mrb[0].mxu0
    %v175 = vadd.f32 %v120, %v174
    %v176 = vpop.f32.mrb[0].mxu0
    %v177 = vadd.f32 %v122, %v176
    %v178 = vpop.f32.mrb[0].mxu0
    %v179 = vpop.f32.mrb[0].mxu0
    %180 = vdwg.mxu0
    %v181 = vld [vmem:[%s4] sm:$0x3]
    %v183 = vlaneseq
    %v184 = vshrl.u32 %v183, 7
    %v185 = vsub.s32 0, %v184
    %v186 = vrot.slane %v181, %v185
    %v187 = vlaneseq
    %v188 = vshrl.u32 %v187, 7
    %v189 = vsub.s32 1, %v188
    %v190 = vrot.slane %v181, %v189
    %v193 = vadd.f32 %v175, %v186
    %v194 = vadd.f32 %v177, %v190
    %v195 = vmax.f32 %v193, 0.0
    %v196 = vmax.f32 %v194, 0.0
    %v197 = vpack.c.bf16 %v195, %v195
    %v198 = vpack.c.bf16 %v196, %v196
    %v199 = vld [vmem:[#allocation5] sm:$0xff]
    %v200 = vld [vmem:[#allocation5 + $0x8] sm:$0xff]
    %v201 = vld [vmem:[#allocation5 + $0x10] sm:$0xff]
    %v202 = vld [vmem:[#allocation5 + $0x18] sm:$0xff]
    %v203 = vld [vmem:[#allocation5 + $0x20] sm:$0xff]
    %v204 = vld [vmem:[#allocation5 + $0x28] sm:$0xff]
    %v205 = vld [vmem:[#allocation5 + $0x30] sm:$0xff]
    %v206 = vld [vmem:[#allocation5 + $0x38] sm:$0xff]
    %v207 = vld [vmem:[#allocation5 + $0x40] sm:$0xff]
    %v208 = vld [vmem:[#allocation5 + $0x48] sm:$0xff]
    %v209 = vld [vmem:[#allocation5 + $0x50] sm:$0xff]
    %v210 = vld [vmem:[#allocation5 + $0x58] sm:$0xff]
    %v211 = vld [vmem:[#allocation5 + $0x60] sm:$0xff]
    %v212 = vld [vmem:[#allocation5 + $0x68] sm:$0xff]
    %v213 = vld [vmem:[#allocation5 + $0x70] sm:$0xff]
    %v214 = vld [vmem:[#allocation5 + $0x78] sm:$0xff]
    %v215 = vld [vmem:[#allocation5 + $0x80] sm:$0xff]
    %v216 = vld [vmem:[#allocation5 + $0x88] sm:$0xff]
    %v217 = vld [vmem:[#allocation5 + $0x90] sm:$0xff]
    %v218 = vld [vmem:[#allocation5 + $0x98] sm:$0xff]
    %v219 = vld [vmem:[#allocation5 + $0xa0] sm:$0xff]
    %v220 = vld [vmem:[#allocation5 + $0xa8] sm:$0xff]
    %v221 = vld [vmem:[#allocation5 + $0xb0] sm:$0xff]
    %v222 = vld [vmem:[#allocation5 + $0xb8] sm:$0xff]
    %v223 = vld [vmem:[#allocation5 + $0xc0] sm:$0xff]
    %v224 = vld [vmem:[#allocation5 + $0xc8] sm:$0xff]
    %v225 = vld [vmem:[#allocation5 + $0xd0] sm:$0xff]
    %v226 = vld [vmem:[#allocation5 + $0xd8] sm:$0xff]
    %v227 = vld [vmem:[#allocation5 + $0xe0] sm:$0xff]
    %v228 = vld [vmem:[#allocation5 + $0xe8] sm:$0xff]
    %v229 = vld [vmem:[#allocation5 + $0xf0] sm:$0xff]
    %v230 = vld [vmem:[#allocation5 + $0xf8] sm:$0xff]
    %v231 = vld [vmem:[%s6] sm:$0x3]
    %v233 = vlaneseq
    %v234 = vshrl.u32 %v233, 7
    %v235 = vsub.s32 0, %v234
    %v236 = vrot.slane %v231, %v235
    %v237 = vlaneseq
    %v238 = vshrl.u32 %v237, 7
    %v239 = vsub.s32 1, %v238
    %v240 = vrot.slane %v231, %v239
    %v275 = vunpack.c.l.b16 %v199
    %v276 = vunpack.c.h.b16 %v199
    %v277 = vunpack.c.l.b16 %v200
    %v278 = vunpack.c.h.b16 %v200
    %v279 = vunpack.c.l.b16 %v201
    %v280 = vunpack.c.h.b16 %v201
    %v281 = vunpack.c.l.b16 %v202
    %v282 = vunpack.c.h.b16 %v202
    %v283 = vunpack.c.l.b16 %v203
    %v284 = vunpack.c.h.b16 %v203
    %v285 = vunpack.c.l.b16 %v204
    %v286 = vunpack.c.h.b16 %v204
    %v287 = vunpack.c.l.b16 %v205
    %v288 = vunpack.c.h.b16 %v205
    %v289 = vunpack.c.l.b16 %v206
    %v290 = vunpack.c.h.b16 %v206
    %v291 = vunpack.c.l.b16 %v207
    %v292 = vunpack.c.h.b16 %v207
    %v293 = vunpack.c.l.b16 %v208
    %v294 = vunpack.c.h.b16 %v208
    %v295 = vunpack.c.l.b16 %v209
    %v296 = vunpack.c.h.b16 %v209
    %v297 = vunpack.c.l.b16 %v210
    %v298 = vunpack.c.h.b16 %v210
    %v299 = vunpack.c.l.b16 %v211
    %v300 = vunpack.c.h.b16 %v211
    %v301 = vunpack.c.l.b16 %v212
    %v302 = vunpack.c.h.b16 %v212
    %v303 = vunpack.c.l.b16 %v213
    %v304 = vunpack.c.h.b16 %v213
    %v305 = vunpack.c.l.b16 %v214
    %v306 = vunpack.c.h.b16 %v214
    %v307 = vunpack.c.l.b16 %v215
    %v308 = vunpack.c.h.b16 %v215
    %v309 = vunpack.c.l.b16 %v216
    %v310 = vunpack.c.h.b16 %v216
    %v311 = vunpack.c.l.b16 %v217
    %v312 = vunpack.c.h.b16 %v217
    %v313 = vunpack.c.l.b16 %v218
    %v314 = vunpack.c.h.b16 %v218
    %v315 = vunpack.c.l.b16 %v219
    %v316 = vunpack.c.h.b16 %v219
    %v317 = vunpack.c.l.b16 %v220
    %v318 = vunpack.c.h.b16 %v220
    %v319 = vunpack.c.l.b16 %v221
    %v320 = vunpack.c.h.b16 %v221
    %v321 = vunpack.c.l.b16 %v222
    %v322 = vunpack.c.h.b16 %v222
    %v323 = vunpack.c.l.b16 %v223
    %v324 = vunpack.c.h.b16 %v223
    %v325 = vunpack.c.l.b16 %v224
    %v326 = vunpack.c.h.b16 %v224
    %v327 = vunpack.c.l.b16 %v225
    %v328 = vunpack.c.h.b16 %v225
    %v329 = vunpack.c.l.b16 %v226
    %v330 = vunpack.c.h.b16 %v226
    %v331 = vunpack.c.l.b16 %v227
    %v332 = vunpack.c.h.b16 %v227
    %v333 = vunpack.c.l.b16 %v228
    %v334 = vunpack.c.h.b16 %v228
    %v335 = vunpack.c.l.b16 %v229
    %v336 = vunpack.c.h.b16 %v229
    %v337 = vunpack.c.l.b16 %v230
    %v338 = vunpack.c.h.b16 %v230
    %v339 = vpack.c.b16 %v277, %v275
    %v340 = vpack.c.b16 %v278, %v276
    %v341 = vpack.c.b16 %v281, %v279
    %v342 = vpack.c.b16 %v282, %v280
    %v343 = vpack.c.b16 %v285, %v283
    %v344 = vpack.c.b16 %v286, %v284
    %v345 = vpack.c.b16 %v289, %v287
    %v346 = vpack.c.b16 %v290, %v288
    %v347 = vpack.c.b16 %v293, %v291
    %v348 = vpack.c.b16 %v294, %v292
    %v349 = vpack.c.b16 %v297, %v295
    %v350 = vpack.c.b16 %v298, %v296
    %v351 = vpack.c.b16 %v301, %v299
    %v352 = vpack.c.b16 %v302, %v300
    %v353 = vpack.c.b16 %v305, %v303
    %v354 = vpack.c.b16 %v306, %v304
    %v355 = vpack.c.b16 %v309, %v307
    %v356 = vpack.c.b16 %v310, %v308
    %v357 = vpack.c.b16 %v313, %v311
    %v358 = vpack.c.b16 %v314, %v312
    %v359 = vpack.c.b16 %v317, %v315
    %v360 = vpack.c.b16 %v318, %v316
    %v361 = vpack.c.b16 %v321, %v319
    %v362 = vpack.c.b16 %v322, %v320
    %v363 = vpack.c.b16 %v325, %v323
    %v364 = vpack.c.b16 %v326, %v324
    %v365 = vpack.c.b16 %v329, %v327
    %v366 = vpack.c.b16 %v330, %v328
    %v367 = vpack.c.b16 %v333, %v331
    %v368 = vpack.c.b16 %v334, %v332
    %v369 = vpack.c.b16 %v337, %v335
    %v370 = vpack.c.b16 %v338, %v336
    %403 = vmatprep.subr.bf16.mxu0 %v340
    %404 = vmatpush1.bf16.msra.mxu0 %v339
    %405 = vmatprep.subr.bf16.mxu0 %v342
    %406 = vmatpush1.bf16.msra.mxu0 %v341
    %407 = vmatprep.subr.bf16.mxu0 %v344
    %408 = vmatpush1.bf16.msra.mxu0 %v343
    %409 = vmatprep.subr.bf16.mxu0 %v346
    %410 = vmatpush1.bf16.msra.mxu0 %v345
    %411 = vmatprep.subr.bf16.mxu0 %v348
    %412 = vmatpush1.bf16.msra.mxu0 %v347
    %413 = vmatprep.subr.bf16.mxu0 %v350
    %414 = vmatpush1.bf16.msra.mxu0 %v349
    %415 = vmatprep.subr.bf16.mxu0 %v352
    %416 = vmatpush1.bf16.msra.mxu0 %v351
    %417 = vmatprep.subr.bf16.mxu0 %v354
    %418 = vmatpush1.bf16.msra.mxu0 %v353
    %419 = vmatprep.subr.bf16.mxu0 %v356
    %420 = vmatpush1.bf16.msra.mxu0 %v355
    %421 = vmatprep.subr.bf16.mxu0 %v358
    %422 = vmatpush1.bf16.msra.mxu0 %v357
    %423 = vmatprep.subr.bf16.mxu0 %v360
    %424 = vmatpush1.bf16.msra.mxu0 %v359
    %425 = vmatprep.subr.bf16.mxu0 %v362
    %426 = vmatpush1.bf16.msra.mxu0 %v361
    %427 = vmatprep.subr.bf16.mxu0 %v364
    %428 = vmatpush1.bf16.msra.mxu0 %v363
    %429 = vmatprep.subr.bf16.mxu0 %v366
    %430 = vmatpush1.bf16.msra.mxu0 %v365
    %431 = vmatprep.subr.bf16.mxu0 %v368
    %432 = vmatpush1.bf16.msra.mxu0 %v367
    %433 = vmatprep.subr.bf16.mxu0 %v370
    %434 = vmatpush1.bf16.msra.mxu0 %v369
    %435 = vmatprep.mubr.bf16.mxu0 %v198
    %436 = vmatmul.mubr.bf16.gmra.mrb[0].mxu0 %v197
    %v437 = vpop.f32.mrb[0].mxu0
    %v438 = vadd.f32 %v236, %v437
    %v439 = vpop.f32.mrb[0].mxu0
    %v440 = vadd.f32 %v240, %v439
    %v441 = vpop.f32.mrb[0].mxu0
    %v442 = vpop.f32.mrb[0].mxu0
    %443 = vdwg.mxu0
    %v444 = vmax.f32 %v438, 0.0
    %v445 = vmax.f32 %v440, 0.0
    %v446 = vld [vmem:[%s7] sm:$0x3]
    %v448 = vlaneseq
    %v449 = vshrl.u32 %v448, 7
    %v450 = vsub.s32 0, %v449
    %v451 = vrot.slane %v446, %v450
    %v452 = vlaneseq
    %v453 = vshrl.u32 %v452, 7
    %v454 = vsub.s32 1, %v453
    %v455 = vrot.slane %v446, %v454
    %v458 = vmul.f32 %v444, %v451
    %v459 = vmul.f32 %v445, %v455
    %v460 = vadd.f32 %v458, %v459
    %461 = vadd.xlane.f32.xlu0 %v460
    %v462 = vpop.xlane.xlu0 %461
    %s463 = sld [smem:[#allocation2]]
    %v464 = vstv %s463
    %v465 = vadd.f32 %v462, %v464
    %vm466 = vcmask 7168
    %467 = vst.msk [vmem:[%s9] sm:$0xff] %vm466, %v465
    // Predicated region
    $region46: #{tpu_custom_call.1} parent=1 // pred_check
      _
    $region47: #{tpu_custom_call.1} parent=1 // pred_check_branch
      %469 = sbr.rel (0) target = $region49
    $region48: #{tpu_custom_call.1} parent=1 // pred_region
      _
    $region49: #{tpu_custom_call.1} parent=1 // pred_fallthru
      _
    // Predicated region
    $region50: #{tpu_custom_call.1} parent=1 // pred_check
      _
    $region51: #{tpu_custom_call.1} parent=1 // pred_check_branch
      %471 = sbr.rel (0) target = $region53
    $region52: #{tpu_custom_call.1} parent=1 // pred_region
      _
    $region53: #{tpu_custom_call.1} parent=1 // pred_fallthru
      _
    %472 = vsyncpa [#allocation4], 1
    %473 = vsyncpa [#allocation6], 1

</llo_original>
